<compile_context>
chip_gen: v7x
topology: tpu7x:2x2x1
jax: 0.10.0
libtpu: 0.0.40
codegen_flags: <defaults>
</compile_context>

<pallas_src>
import jax
import jax.numpy as jnp
from jax.experimental import pallas as pl
from jax.experimental.pallas import tpu as pltpu


def _round_up(x: int, m: int) -> int:
    return ((x + m - 1) // m) * m


# --------------------------------------------------------------------------
# Kernel
# --------------------------------------------------------------------------
def _discriminator_kernel(x_ref, w1_ref, b1_ref, w2_ref, b2_ref, w3_ref,
                          b3_ref, out_ref):
    # x tile [tm, D_in] already bf16 (cast hoisted to the wrapper).
    x = x_ref[...]

    # Linear1 + LeakyReLU(0.2)   (f32 MXU accumulation, f32 epilogue)
    h = jnp.dot(x, w1_ref[...], preferred_element_type=jnp.float32)
    h = h + b1_ref[...]
    h = jnp.where(h > 0.0, h, 0.2 * h)

    # Linear2 + LeakyReLU(0.2)
    h = jnp.dot(h.astype(jnp.bfloat16), w2_ref[...],
                preferred_element_type=jnp.float32)
    h = h + b2_ref[...]
    h = jnp.where(h > 0.0, h, 0.2 * h)

    # Linear3 + Sigmoid (exp on EUP; approx reciprocal also on EUP -> no VALU
    # divide).
    o = jnp.dot(h.astype(jnp.bfloat16), w3_ref[...],
                preferred_element_type=jnp.float32)
    o = o + b3_ref[...]
    o = pl.reciprocal(1.0 + jnp.exp(-o), approx=True)

    out_ref[...] = o.astype(out_ref.dtype)   # bf16 lane-dense store


# --------------------------------------------------------------------------
# One-time parameter preparation (hoisted out of the per-call path)
# --------------------------------------------------------------------------
def prepare_params(w1, b1, w2, b2, w3, b3):
    """Pad output feature dims to multiples of 128 and cast weights to bf16.

    Call ONCE at init -- not per forward.  Returns (padded_params, d_out).
    Padding is exact: padded weight rows/cols and biases are zero and
    LeakyReLU(0) == 0, so padded hidden lanes stay zero; padded output lanes
    (sigmoid(0) = 0.5) are sliced off by the wrapper.
    """
    d_in, hidden = w1.shape
    d_out = w3.shape[1]
    h_p = _round_up(hidden, 128)
    d_out_p = _round_up(d_out, 128)
    bf16, f32 = jnp.bfloat16, jnp.float32

    w1p = jnp.zeros((d_in, h_p), bf16).at[:, :hidden].set(w1.astype(bf16))
    w2p = jnp.zeros((h_p, h_p), bf16).at[:hidden, :hidden].set(w2.astype(bf16))
    w3p = jnp.zeros((h_p, d_out_p), bf16).at[:hidden, :d_out].set(
        w3.astype(bf16))
    b1p = jnp.zeros((1, h_p), f32).at[:, :hidden].set(
        b1.reshape(1, -1).astype(f32))
    b2p = jnp.zeros((1, h_p), f32).at[:, :hidden].set(
        b2.reshape(1, -1).astype(f32))
    b3p = jnp.zeros((1, d_out_p), f32).at[:, :d_out].set(
        b3.reshape(1, -1).astype(f32))
    return (w1p, b1p, w2p, b2p, w3p, b3p), d_out


# --------------------------------------------------------------------------
# Wrapper
# --------------------------------------------------------------------------
def _choose_tm(batch: int, block_rows: int = 512) -> int:
    """Batch tile size.

    * tiny batches: one full-dim block (block dim == array dim, no partial
      blocks, no (16,128) tiling constraint),
    * otherwise: multiple of 16 (bf16 sublane tiling), >=128 rows to feed the
      MXU, and >=2 grid steps so the 'parallel' axis uses both v7x cores.
    """
    if batch <= 128:
        return batch
    half = _round_up(pl.cdiv(batch, 2), 16)
    return max(128, min(block_rows, half))


def _vmem_limit_bytes(tm: int, d_in: int, h_p: int, d_out_p: int) -> int:
    """Scoped-VMEM limit derived from actual tile sizes (+50% headroom)."""
    weights = 2 * 2 * (d_in * h_p + h_p * h_p + h_p * d_out_p)  # bf16, 2 bufs
    biases = 2 * 4 * (h_p + h_p + d_out_p)                      # f32,  2 bufs
    x_tiles = 2 * 2 * tm * d_in                                 # bf16, 2 bufs
    out_tiles = 2 * 2 * tm * d_out_p                            # bf16, 2 bufs
    hidden = 2 * 4 * tm * h_p                                   # f32 intermediates
    need = weights + biases + x_tiles + out_tiles + hidden
    return max(min(int(1.5 * need) + (2 << 20), 100 << 20), 32 << 20)


def discriminator_forward(x, padded_params, d_out, *, block_rows=512):
    """Fused Discriminator MLP.  x: [B, D_in] f32 -> [B, d_out] f32."""
    w1p, b1p, w2p, b2p, w3p, b3p = padded_params
    B, d_in = x.shape
    assert w1p.shape[0] == d_in
    h_p = w1p.shape[1]
    d_out_p = w3p.shape[1]

    tm = _choose_tm(B, block_rows)
    grid = (pl.cdiv(B, tm),)

    # Only per-call data movement: one bf16 cast of x (halves streamed bytes).
    x_bf16 = x.astype(jnp.bfloat16)

    # Weights / biases: same block every grid step -> DMAed once, VMEM-resident.
    resident = lambda shape: pl.BlockSpec(shape, lambda i: (0, 0))

    out_p = pl.pallas_call(
        _discriminator_kernel,
        out_shape=jax.ShapeDtypeStruct((B, d_out_p), jnp.bfloat16),
        grid_spec=pltpu.PrefetchScalarGridSpec(
            num_scalar_prefetch=0,
            grid=grid,
            in_specs=[
                pl.BlockSpec((tm, d_in), lambda i: (i, 0)),  # x (streams, bf16)
                resident((d_in, h_p)),                       # w1
                resident((1, h_p)),                          # b1
                resident((h_p, h_p)),                        # w2
                resident((1, h_p)),                          # b2
                resident((h_p, d_out_p)),                    # w3
                resident((1, d_out_p)),                      # b3
            ],
            out_specs=pl.BlockSpec((tm, d_out_p), lambda i: (i, 0)),
        ),
        compiler_params=pltpu.CompilerParams(
            dimension_semantics=("parallel",),   # megacore over batch tiles
            vmem_limit_bytes=_vmem_limit_bytes(tm, d_in, h_p, d_out_p),
        ),
    )(x_bf16, w1p, b1p, w2p, b2p, w3p, b3p)

    # Drop padded output lanes; cast back to f32 (tiny).
    return out_p[:, :d_out].astype(jnp.float32)


# --------------------------------------------------------------------------
# Init + pure-JAX reference
# --------------------------------------------------------------------------
def init_params(key, input_dim, hidden_dim, output_dim):
    """Deterministic PyTorch-Linear-style uniform init (W stored [in, out])."""
    ks = jax.random.split(key, 6)

    def lin(kw, kb, fan_in, fan_out):
        bound = 1.0 / float(fan_in) ** 0.5
        w = jax.random.uniform(kw, (fan_in, fan_out), jnp.float32,
                               minval=-bound, maxval=bound)
        b = jax.random.uniform(kb, (1, fan_out), jnp.float32,
                               minval=-bound, maxval=bound)
        return w, b

    w1, b1 = lin(ks[0], ks[1], input_dim, hidden_dim)
    w2, b2 = lin(ks[2], ks[3], hidden_dim, hidden_dim)
    w3, b3 = lin(ks[4], ks[5], hidden_dim, output_dim)
    return w1, b1, w2, b2, w3, b3


def discriminator_reference(x, w1, b1, w2, b2, w3, b3):
    """Pure-JAX f32 reference for correctness checking."""
    h = x @ w1 + b1
    h = jnp.where(h > 0.0, h, 0.2 * h)
    h = h @ w2 + b2
    h = jnp.where(h > 0.0, h, 0.2 * h)
    return jax.nn.sigmoid(h @ w3 + b3)


if __name__ == "__main__":
    key = jax.random.PRNGKey(0)
    k_x, k_p = jax.random.split(key)

    batch = 8
    input_dim = 16
    hidden_dim = 32
    output_dim = 1          # discriminator: single real/fake score -> sigmoid

    x = jax.random.normal(k_x, (batch, input_dim), jnp.float32)
    raw_params = init_params(k_p, input_dim, hidden_dim, output_dim)

    # One-time padding / bf16 cast (hoisted out of the forward path).
    padded_params, d_out = prepare_params(*raw_params)

    out = discriminator_forward(x, padded_params, d_out)
    out = jax.block_until_ready(out)

    ref = discriminator_reference(x, *raw_params)
    assert out.shape == (batch, output_dim)
    # bf16 matmul inputs / bf16 inter-layer activations / bf16 output with f32
    # accumulation -> slightly loose tolerance vs. the f32 reference.
    assert jnp.allclose(out, ref, atol=2e-2, rtol=2e-2), "mismatch vs reference"

    print("KERNEL_OK")
</pallas_src>

<mosaic_0001>
module attributes {stable_mosaic.version = 11 : i64} {
  func.func @_discriminator_kernel(%arg0: i32, %arg1: memref<8x16xbf16, #tpu.memory_space<vmem>>, %arg2: memref<16x128xbf16, #tpu.memory_space<vmem>>, %arg3: memref<1x128xf32, #tpu.memory_space<vmem>>, %arg4: memref<128x128xbf16, #tpu.memory_space<vmem>>, %arg5: memref<1x128xf32, #tpu.memory_space<vmem>>, %arg6: memref<128x128xbf16, #tpu.memory_space<vmem>>, %arg7: memref<1x128xf32, #tpu.memory_space<vmem>>, %arg8: memref<8x128xbf16, #tpu.memory_space<vmem>>) attributes {dimension_semantics = [#tpu.dimension_semantics<parallel>], iteration_bounds = array<i64: 1>, scalar_prefetch = 0 : i64, scratch_operands = 0 : i64, tpu.core_type = #tpu.core_type<tc>, window_params = [{transform_indices = @transform_0, window_bounds = array<i64: 8, 16>}, {pipeline_mode = #tpu.pipeline_mode<synchronous>, transform_indices = @transform_1, window_bounds = array<i64: 16, 128>}, {pipeline_mode = #tpu.pipeline_mode<synchronous>, transform_indices = @transform_2, window_bounds = array<i64: 1, 128>}, {pipeline_mode = #tpu.pipeline_mode<synchronous>, transform_indices = @transform_3, window_bounds = array<i64: 128, 128>}, {pipeline_mode = #tpu.pipeline_mode<synchronous>, transform_indices = @transform_4, window_bounds = array<i64: 1, 128>}, {pipeline_mode = #tpu.pipeline_mode<synchronous>, transform_indices = @transform_5, window_bounds = array<i64: 128, 128>}, {pipeline_mode = #tpu.pipeline_mode<synchronous>, transform_indices = @transform_6, window_bounds = array<i64: 1, 128>}, {transform_indices = @transform_7, window_bounds = array<i64: 8, 128>}]} {
    %c0 = arith.constant 0 : index
    %c0_0 = arith.constant 0 : index
    %0 = vector.load %arg1[%c0, %c0_0] : memref<8x16xbf16, #tpu.memory_space<vmem>>, vector<8x16xbf16>
    %c0_1 = arith.constant 0 : index
    %c0_2 = arith.constant 0 : index
    %1 = vector.load %arg2[%c0_1, %c0_2] : memref<16x128xbf16, #tpu.memory_space<vmem>>, vector<16x128xbf16>
    %cst = arith.constant dense<0.000000e+00> : vector<8x128xf32>
    %2 = tpu.matmul %0, %1, %cst {dimension_numbers = #tpu.dot_dimension_numbers<[1], [0], [0], [1], [0, 0, 1, 1], [], []>} : vector<8x16xbf16>, vector<16x128xbf16>, vector<8x128xf32> -> vector<8x128xf32>
    %c0_3 = arith.constant 0 : index
    %c0_4 = arith.constant 0 : index
    %3 = vector.load %arg3[%c0_3, %c0_4] : memref<1x128xf32, #tpu.memory_space<vmem>>, vector<1x128xf32>
    %4 = vector.broadcast %3 : vector<1x128xf32> to vector<8x128xf32>
    %5 = arith.addf %2, %4 : vector<8x128xf32>
    %cst_5 = arith.constant 0.000000e+00 : f32
    %6 = vector.broadcast %cst_5 : f32 to vector<8x128xf32>
    %7 = arith.cmpf ogt, %5, %6 : vector<8x128xf32>
    %cst_6 = arith.constant 2.000000e-01 : f32
    %8 = vector.broadcast %cst_6 : f32 to vector<8x128xf32>
    %9 = arith.mulf %8, %5 : vector<8x128xf32>
    %10 = arith.select %7, %5, %9 : vector<8x128xi1>, vector<8x128xf32>
    %11 = arith.truncf %10 : vector<8x128xf32> to vector<8x128xbf16>
    %c0_7 = arith.constant 0 : index
    %c0_8 = arith.constant 0 : index
    %12 = vector.load %arg4[%c0_7, %c0_8] : memref<128x128xbf16, #tpu.memory_space<vmem>>, vector<128x128xbf16>
    %cst_9 = arith.constant dense<0.000000e+00> : vector<8x128xf32>
    %13 = tpu.matmul %11, %12, %cst_9 {dimension_numbers = #tpu.dot_dimension_numbers<[1], [0], [0], [1], [0, 0, 1, 1], [], []>} : vector<8x128xbf16>, vector<128x128xbf16>, vector<8x128xf32> -> vector<8x128xf32>
    %c0_10 = arith.constant 0 : index
    %c0_11 = arith.constant 0 : index
    %14 = vector.load %arg5[%c0_10, %c0_11] : memref<1x128xf32, #tpu.memory_space<vmem>>, vector<1x128xf32>
    %15 = vector.broadcast %14 : vector<1x128xf32> to vector<8x128xf32>
    %16 = arith.addf %13, %15 : vector<8x128xf32>
    %cst_12 = arith.constant 0.000000e+00 : f32
    %17 = vector.broadcast %cst_12 : f32 to vector<8x128xf32>
    %18 = arith.cmpf ogt, %16, %17 : vector<8x128xf32>
    %cst_13 = arith.constant 2.000000e-01 : f32
    %19 = vector.broadcast %cst_13 : f32 to vector<8x128xf32>
    %20 = arith.mulf %19, %16 : vector<8x128xf32>
    %21 = arith.select %18, %16, %20 : vector<8x128xi1>, vector<8x128xf32>
    %22 = arith.truncf %21 : vector<8x128xf32> to vector<8x128xbf16>
    %c0_14 = arith.constant 0 : index
    %c0_15 = arith.constant 0 : index
    %23 = vector.load %arg6[%c0_14, %c0_15] : memref<128x128xbf16, #tpu.memory_space<vmem>>, vector<128x128xbf16>
    %cst_16 = arith.constant dense<0.000000e+00> : vector<8x128xf32>
    %24 = tpu.matmul %22, %23, %cst_16 {dimension_numbers = #tpu.dot_dimension_numbers<[1], [0], [0], [1], [0, 0, 1, 1], [], []>} : vector<8x128xbf16>, vector<128x128xbf16>, vector<8x128xf32> -> vector<8x128xf32>
    %c0_17 = arith.constant 0 : index
    %c0_18 = arith.constant 0 : index
    %25 = vector.load %arg7[%c0_17, %c0_18] : memref<1x128xf32, #tpu.memory_space<vmem>>, vector<1x128xf32>
    %26 = vector.broadcast %25 : vector<1x128xf32> to vector<8x128xf32>
    %27 = arith.addf %24, %26 : vector<8x128xf32>
    %cst_19 = arith.constant 0.000000e+00 : f32
    %28 = vector.broadcast %cst_19 : f32 to vector<8x128xf32>
    %29 = arith.subf %28, %27 : vector<8x128xf32>
    %30 = math.exp %29 : vector<8x128xf32>
    %cst_20 = arith.constant 1.000000e+00 : f32
    %31 = vector.broadcast %cst_20 : f32 to vector<8x128xf32>
    %32 = arith.addf %31, %30 : vector<8x128xf32>
    %33 = tpu.reciprocal %32 {approx = true} : vector<8x128xf32> -> vector<8x128xf32>
    %34 = arith.truncf %33 : vector<8x128xf32> to vector<8x128xbf16>
    %c0_21 = arith.constant 0 : index
    %c0_22 = arith.constant 0 : index
    %35 = vector.load %arg8[%c0_21, %c0_22] : memref<8x128xbf16, #tpu.memory_space<vmem>>, vector<8x128xbf16>
    tpu.vector_store %arg8[%c0_21, %c0_22], %34 {strides = array<i32>} : memref<8x128xbf16, #tpu.memory_space<vmem>>, vector<8x128xbf16>,
    return
  }
  func.func @transform_0(%arg0: i32) -> (i32, i32) {
    %c0_i32 = arith.constant 0 : i32
    %c0_i32_0 = arith.constant 0 : i32
    return %arg0, %c0_i32 : i32, i32
  }
  func.func @transform_1(%arg0: i32) -> (i32, i32) {
    %c0_i32 = arith.constant 0 : i32
    %c0_i32_0 = arith.constant 0 : i32
    %c0_i32_1 = arith.constant 0 : i32
    return %c0_i32, %c0_i32_0 : i32, i32
  }
  func.func @transform_2(%arg0: i32) -> (i32, i32) {
    %c0_i32 = arith.constant 0 : i32
    %c0_i32_0 = arith.constant 0 : i32
    %c0_i32_1 = arith.constant 0 : i32
    return %c0_i32, %c0_i32_0 : i32, i32
  }
  func.func @transform_3(%arg0: i32) -> (i32, i32) {
    %c0_i32 = arith.constant 0 : i32
    %c0_i32_0 = arith.constant 0 : i32
    %c0_i32_1 = arith.constant 0 : i32
    return %c0_i32, %c0_i32_0 : i32, i32
  }
  func.func @transform_4(%arg0: i32) -> (i32, i32) {
    %c0_i32 = arith.constant 0 : i32
    %c0_i32_0 = arith.constant 0 : i32
    %c0_i32_1 = arith.constant 0 : i32
    return %c0_i32, %c0_i32_0 : i32, i32
  }
  func.func @transform_5(%arg0: i32) -> (i32, i32) {
    %c0_i32 = arith.constant 0 : i32
    %c0_i32_0 = arith.constant 0 : i32
    %c0_i32_1 = arith.constant 0 : i32
    return %c0_i32, %c0_i32_0 : i32, i32
  }
  func.func @transform_6(%arg0: i32) -> (i32, i32) {
    %c0_i32 = arith.constant 0 : i32
    %c0_i32_0 = arith.constant 0 : i32
    %c0_i32_1 = arith.constant 0 : i32
    return %c0_i32, %c0_i32_0 : i32, i32
  }
  func.func @transform_7(%arg0: i32) -> (i32, i32) {
    %c0_i32 = arith.constant 0 : i32
    %c0_i32_0 = arith.constant 0 : i32
    return %arg0, %c0_i32 : i32, i32
  }
}

</mosaic_0001>

<llo_original>
// kernel: tpu_custom_call.1
$region0: #{tpu_custom_call.1}
  #allocation0 [shape = 'u32[]', space=smem, size = 0x4, offset = 0x4, fixed_abs, tag = 'smem constant byte address 0x4 - core index']
  #allocation1 [shape = 'u32[144,128]{1,0:T(1,128)}', space=vmem, size = 0x12000, scoped, tag = 'internal scratch']
  %s0 = inlined_call_operand.hbm [shape: bf16[8,16], index: 0, kind: input, shape index: {}]
  %s1 = inlined_call_operand.hbm [shape: bf16[16,128], index: 1, kind: input, shape index: {}]
  %s2 = inlined_call_operand.vmem [shape: f32[1,128], index: 2, kind: input, shape index: {}]
  %s3 = inlined_call_operand.hbm [shape: bf16[128,128], index: 3, kind: input, shape index: {}]
  %s4 = inlined_call_operand.vmem [shape: f32[1,128], index: 4, kind: input, shape index: {}]
  %s5 = inlined_call_operand.hbm [shape: bf16[128,128], index: 5, kind: input, shape index: {}]
  %s6 = inlined_call_operand.vmem [shape: f32[1,128], index: 6, kind: input, shape index: {}]
  %s7 = inlined_call_operand.hbm [shape: bf16[8,128], index: 7, kind: output, shape index: {}]
  %s8 = sld [smem:[#allocation0]]
  $region54: #{tpu_custom_call.1} parent=0
    _
  %s10 = ssub.s32 1, %s8
  %s11 = scalar_select 0, %s10, %s8
  $region1: #{tpu_custom_call.1} parent=0
    #allocation2 [shape = 'u8[2048]{0}', space=vmem, size = 0x800, scoped, tag = 'input window, operand 0, single buffered']
    #allocation3 [shape = 's32[1]{0}', space=sflag, size = 0x4, scoped, tag = 'scoped memory for tpu_custom_call.1']
    #allocation4 [shape = 's32[1]{0}', space=sflag, size = 0x4, scoped, tag = 'scoped memory for tpu_custom_call.1']
    #allocation5 [shape = 'u8[4096]{0}', space=vmem, size = 0x1000, scoped, tag = 'input window, operand 1, single buffered']
    #allocation6 [shape = 's32[1]{0}', space=sflag, size = 0x4, scoped, tag = 'scoped memory for tpu_custom_call.1']
    #allocation7 [shape = 'u8[32768]{0}', space=vmem, size = 0x8000, scoped, tag = 'input window, operand 3, single buffered']
    #allocation8 [shape = 'u8[32768]{0}', space=vmem, size = 0x8000, scoped, tag = 'input window, operand 5, single buffered']
    #allocation9 [shape = 's32[1]{0}', space=sflag, size = 0x4, scoped, tag = 'scoped memory for tpu_custom_call.1']
    #allocation10 [shape = 'u8[2048]{0}', space=vmem, size = 0x800, scoped, tag = 'output window, operand 0, single buffered']
    %12 = vsyncpa [#allocation3], 0
    %13 = vsyncpa [#allocation6], 0
    %14 = vsyncpa [#allocation9], 0
    %15 = vsyncpa [#allocation4], 0
    // Predicated region
    $region2: #{tpu_custom_call.1} parent=1 // pred_check
      _
    $region3: #{tpu_custom_call.1} parent=1 // pred_check_branch
      %17 = sbr.rel (0) target = $region5
    $region4: #{tpu_custom_call.1} parent=1 // pred_region
      %s19 = ssub.s32 64, 64
      %20 = vsyncadd [#allocation3], %s19
      %s22 = sshll.u32 [#allocation2], 4
      %s23 = int_to_ptr.vmem [resolvable:$true] %s22
      %25 = dma.hbm_to_vmem [thread:$0]  %s0, 64, %s23, [#allocation3]
    $region5: #{tpu_custom_call.1} parent=1 // pred_fallthru
      _
    // Predicated region
    $region6: #{tpu_custom_call.1} parent=1 // pred_check
      _
    $region7: #{tpu_custom_call.1} parent=1 // pred_check_branch
      %27 = sbr.rel (0) target = $region9
    $region8: #{tpu_custom_call.1} parent=1 // pred_region
      %s29 = ssub.s32 128, 128
      %30 = vsyncadd [#allocation6], %s29
      %s31 = sshll.u32 [#allocation5], 4
      %s32 = int_to_ptr.vmem [resolvable:$true] %s31
      %37 = dma.hbm_to_vmem [thread:$0]  %s1, 128, %s32, [#allocation6], 64, 64, 4
    $region9: #{tpu_custom_call.1} parent=1 // pred_fallthru
      _
    // Predicated region
    $region10: #{tpu_custom_call.1} parent=1 // pred_check
      _
    $region11: #{tpu_custom_call.1} parent=1 // pred_check_branch
      %39 = sbr.rel (0) target = $region13
    $region12: #{tpu_custom_call.1} parent=1 // pred_region
      _
    $region13: #{tpu_custom_call.1} parent=1 // pred_fallthru
      _
    // Predicated region
    $region14: #{tpu_custom_call.1} parent=1 // pred_check
      _
    $region15: #{tpu_custom_call.1} parent=1 // pred_check_branch
      %41 = sbr.rel (0) target = $region17
    $region16: #{tpu_custom_call.1} parent=1 // pred_region
      %s43 = ssub.s32 1024, 1024
      %44 = vsyncadd [#allocation6], %s43
      %s45 = sshll.u32 [#allocation7], 4
      %s46 = int_to_ptr.vmem [resolvable:$true] %s45
      %51 = dma.hbm_to_vmem [thread:$0]  %s3, 1024, %s46, [#allocation6], 64, 64, 4
    $region17: #{tpu_custom_call.1} parent=1 // pred_fallthru
      _
    // Predicated region
    $region18: #{tpu_custom_call.1} parent=1 // pred_check
      _
    $region19: #{tpu_custom_call.1} parent=1 // pred_check_branch
      %53 = sbr.rel (0) target = $region21
    $region20: #{tpu_custom_call.1} parent=1 // pred_region
      _
    $region21: #{tpu_custom_call.1} parent=1 // pred_fallthru
      _
    // Predicated region
    $region22: #{tpu_custom_call.1} parent=1 // pred_check
      _
    $region23: #{tpu_custom_call.1} parent=1 // pred_check_branch
      %55 = sbr.rel (0) target = $region25
    $region24: #{tpu_custom_call.1} parent=1 // pred_region
      %s57 = ssub.s32 1024, 1024
      %58 = vsyncadd [#allocation9], %s57
      %s59 = sshll.u32 [#allocation8], 4
      %s60 = int_to_ptr.vmem [resolvable:$true] %s59
      %65 = dma.hbm_to_vmem [thread:$0]  %s5, 1024, %s60, [#allocation9], 64, 64, 4
    $region25: #{tpu_custom_call.1} parent=1 // pred_fallthru
      _
    // Predicated region
    $region26: #{tpu_custom_call.1} parent=1 // pred_check
      _
    $region27: #{tpu_custom_call.1} parent=1 // pred_check_branch
      %67 = sbr.rel (0) target = $region29
    $region28: #{tpu_custom_call.1} parent=1 // pred_region
      _
    $region29: #{tpu_custom_call.1} parent=1 // pred_fallthru
      _
    // Predicated region
    $region30: #{tpu_custom_call.1} parent=1 // pred_check
      _
    $region31: #{tpu_custom_call.1} parent=1 // pred_check_branch
      %69 = sbr.rel (0) target = $region33
    $region32: #{tpu_custom_call.1} parent=1 // pred_region
      %70 = dma.done [#allocation3], 64
    $region33: #{tpu_custom_call.1} parent=1 // pred_fallthru
      _
    // Predicated region
    $region34: #{tpu_custom_call.1} parent=1 // pred_check
      _
    $region35: #{tpu_custom_call.1} parent=1 // pred_check_branch
      %72 = sbr.rel (0) target = $region37
    $region36: #{tpu_custom_call.1} parent=1 // pred_region
      %73 = dma.done [#allocation6], 128
    $region37: #{tpu_custom_call.1} parent=1 // pred_fallthru
      _
    // Predicated region
    $region38: #{tpu_custom_call.1} parent=1 // pred_check
      _
    $region39: #{tpu_custom_call.1} parent=1 // pred_check_branch
      %75 = sbr.rel (0) target = $region41
    $region40: #{tpu_custom_call.1} parent=1 // pred_region
      %76 = dma.done [#allocation6], 1024
    $region41: #{tpu_custom_call.1} parent=1 // pred_fallthru
      _
    // Predicated region
    $region42: #{tpu_custom_call.1} parent=1 // pred_check
      _
    $region43: #{tpu_custom_call.1} parent=1 // pred_check_branch
      %78 = sbr.rel (0) target = $region45
    $region44: #{tpu_custom_call.1} parent=1 // pred_region
      %79 = dma.done [#allocation9], 1024
    $region45: #{tpu_custom_call.1} parent=1 // pred_fallthru
      _
    %v81 = vld [vmem:[#allocation2] sm:$0xf]
    %v82 = vld [vmem:[#allocation5] sm:$0xf]
    %v83 = vld [vmem:[#allocation5 + $0x4] sm:$0xf]
    %v84 = vld [vmem:[%s2] sm:$0x1]
    %v86 = vlaneseq
    %v87 = vshrl.u32 %v86, 7
    %v88 = vsub.s32 0, %v87
    %v89 = vrot.slane %v84, %v88
    %v93 = vunpack.c.l.b16 %v82
    %v94 = vunpack.c.l.b16 %v83
    %v95 = vpack.c.b16 %v94, %v93
    %vm97 = vcmask 130048
    %v99 = vsel %vm97, %v81, 0
    %101 = vmatprep.subr.bf16.mxu0 0
    %102 = vmatpush1.bf16.msra.mxu0 %v95
    %103 = vmatprep.subr.bf16.mxu0 0
    %104 = vmatpush1.bf16.msra.mxu0 0
    %105 = vmatprep.subr.bf16.mxu0 0
    %106 = vmatpush1.bf16.msra.mxu0 0
    %107 = vmatprep.subr.bf16.mxu0 0
    %108 = vmatpush1.bf16.msra.mxu0 0
    %109 = vmatprep.subr.bf16.mxu0 0
    %110 = vmatpush1.bf16.msra.mxu0 0
    %111 = vmatprep.subr.bf16.mxu0 0
    %112 = vmatpush1.bf16.msra.mxu0 0
    %113 = vmatprep.subr.bf16.mxu0 0
    %114 = vmatpush1.bf16.msra.mxu0 0
    %115 = vmatprep.subr.bf16.mxu0 0
    %116 = vmatpush1.bf16.msra.mxu0 0
    %117 = vmatprep.subr.bf16.mxu0 0
    %118 = vmatpush1.bf16.msra.mxu0 0
    %119 = vmatprep.subr.bf16.mxu0 0
    %120 = vmatpush1.bf16.msra.mxu0 0
    %121 = vmatprep.subr.bf16.mxu0 0
    %122 = vmatpush1.bf16.msra.mxu0 0
    %123 = vmatprep.subr.bf16.mxu0 0
    %124 = vmatpush1.bf16.msra.mxu0 0
    %125 = vmatprep.subr.bf16.mxu0 0
    %126 = vmatpush1.bf16.msra.mxu0 0
    %127 = vmatprep.subr.bf16.mxu0 0
    %128 = vmatpush1.bf16.msra.mxu0 0
    %129 = vmatprep.subr.bf16.mxu0 0
    %130 = vmatpush1.bf16.msra.mxu0 0
    %131 = vmatprep.subr.bf16.mxu0 0
    %132 = vmatpush1.bf16.msra.mxu0 0
    %133 = vmatprep.mubr.bf16.mxu0 0
    %134 = vmatmul.mubr.bf16.gmra.mrb[0].mxu0 %v99
    %v135 = vpop.f32.mrb[0].mxu0
    %v136 = vadd.f32 %v89, %v135
    %v137 = vpop.f32.mrb[0].mxu0
    %v138 = vpop.f32.mrb[0].mxu0
    %v139 = vpop.f32.mrb[0].mxu0
    %140 = vdwg.mxu0
    %vm141 = vcmp.gt.f32.partialorder %v136, 0.0
    %v142 = vmul.f32 %v136, 0.2
    %v143 = vsel %vm141, %v136, %v142
    %v144 = vpack.c.bf16 %v143, %v143
    %v145 = vld [vmem:[#allocation7] sm:$0xf]
    %v146 = vld [vmem:[#allocation7 + $0x4] sm:$0xf]
    %v147 = vld [vmem:[#allocation7 + $0x8] sm:$0xf]
    %v148 = vld [vmem:[#allocation7 + $0xc] sm:$0xf]
    %v149 = vld [vmem:[#allocation7 + $0x10] sm:$0xf]
    %v150 = vld [vmem:[#allocation7 + $0x14] sm:$0xf]
    %v151 = vld [vmem:[#allocation7 + $0x18] sm:$0xf]
    %v152 = vld [vmem:[#allocation7 + $0x1c] sm:$0xf]
    %v153 = vld [vmem:[#allocation7 + $0x20] sm:$0xf]
    %v154 = vld [vmem:[#allocation7 + $0x24] sm:$0xf]
    %v155 = vld [vmem:[#allocation7 + $0x28] sm:$0xf]
    %v156 = vld [vmem:[#allocation7 + $0x2c] sm:$0xf]
    %v157 = vld [vmem:[#allocation7 + $0x30] sm:$0xf]
    %v158 = vld [vmem:[#allocation7 + $0x34] sm:$0xf]
    %v159 = vld [vmem:[#allocation7 + $0x38] sm:$0xf]
    %v160 = vld [vmem:[#allocation7 + $0x3c] sm:$0xf]
    %v161 = vld [vmem:[%s4] sm:$0x1]
    %v163 = vlaneseq
    %v164 = vshrl.u32 %v163, 7
    %v165 = vsub.s32 0, %v164
    %v166 = vrot.slane %v161, %v165
    %v184 = vunpack.c.l.b16 %v145
    %v185 = vunpack.c.l.b16 %v146
    %v186 = vunpack.c.l.b16 %v147
    %v187 = vunpack.c.l.b16 %v148
    %v188 = vunpack.c.l.b16 %v149
    %v189 = vunpack.c.l.b16 %v150
    %v190 = vunpack.c.l.b16 %v151
    %v191 = vunpack.c.l.b16 %v152
    %v192 = vunpack.c.l.b16 %v153
    %v193 = vunpack.c.l.b16 %v154
    %v194 = vunpack.c.l.b16 %v155
    %v195 = vunpack.c.l.b16 %v156
    %v196 = vunpack.c.l.b16 %v157
    %v197 = vunpack.c.l.b16 %v158
    %v198 = vunpack.c.l.b16 %v159
    %v199 = vunpack.c.l.b16 %v160
    %v200 = vpack.c.b16 %v185, %v184
    %v201 = vpack.c.b16 %v187, %v186
    %v202 = vpack.c.b16 %v189, %v188
    %v203 = vpack.c.b16 %v191, %v190
    %v204 = vpack.c.b16 %v193, %v192
    %v205 = vpack.c.b16 %v195, %v194
    %v206 = vpack.c.b16 %v197, %v196
    %v207 = vpack.c.b16 %v199, %v198
    %216 = vmatprep.subr.bf16.mxu0 0
    %217 = vmatpush1.bf16.msra.mxu0 %v200
    %218 = vmatprep.subr.bf16.mxu0 0
    %219 = vmatpush1.bf16.msra.mxu0 %v201
    %220 = vmatprep.subr.bf16.mxu0 0
    %221 = vmatpush1.bf16.msra.mxu0 %v202
    %222 = vmatprep.subr.bf16.mxu0 0
    %223 = vmatpush1.bf16.msra.mxu0 %v203
    %224 = vmatprep.subr.bf16.mxu0 0
    %225 = vmatpush1.bf16.msra.mxu0 %v204
    %226 = vmatprep.subr.bf16.mxu0 0
    %227 = vmatpush1.bf16.msra.mxu0 %v205
    %228 = vmatprep.subr.bf16.mxu0 0
    %229 = vmatpush1.bf16.msra.mxu0 %v206
    %230 = vmatprep.subr.bf16.mxu0 0
    %231 = vmatpush1.bf16.msra.mxu0 %v207
    %232 = vmatprep.subr.bf16.mxu0 0
    %233 = vmatpush1.bf16.msra.mxu0 0
    %234 = vmatprep.subr.bf16.mxu0 0
    %235 = vmatpush1.bf16.msra.mxu0 0
    %236 = vmatprep.subr.bf16.mxu0 0
    %237 = vmatpush1.bf16.msra.mxu0 0
    %238 = vmatprep.subr.bf16.mxu0 0
    %239 = vmatpush1.bf16.msra.mxu0 0
    %240 = vmatprep.subr.bf16.mxu0 0
    %241 = vmatpush1.bf16.msra.mxu0 0
    %242 = vmatprep.subr.bf16.mxu0 0
    %243 = vmatpush1.bf16.msra.mxu0 0
    %244 = vmatprep.subr.bf16.mxu0 0
    %245 = vmatpush1.bf16.msra.mxu0 0
    %246 = vmatprep.subr.bf16.mxu0 0
    %247 = vmatpush1.bf16.msra.mxu0 0
    %248 = vmatprep.mubr.bf16.mxu0 0
    %249 = vmatmul.mubr.bf16.gmra.mrb[0].mxu0 %v144
    %v250 = vpop.f32.mrb[0].mxu0
    %v251 = vadd.f32 %v166, %v250
    %v252 = vpop.f32.mrb[0].mxu0
    %v253 = vpop.f32.mrb[0].mxu0
    %v254 = vpop.f32.mrb[0].mxu0
    %255 = vdwg.mxu0
    %vm256 = vcmp.gt.f32.partialorder %v251, 0.0
    %v257 = vmul.f32 %v251, 0.2
    %v258 = vsel %vm256, %v251, %v257
    %v259 = vpack.c.bf16 %v258, %v258
    %v260 = vld [vmem:[#allocation8] sm:$0xf]
    %v261 = vld [vmem:[#allocation8 + $0x4] sm:$0xf]
    %v262 = vld [vmem:[#allocation8 + $0x8] sm:$0xf]
    %v263 = vld [vmem:[#allocation8 + $0xc] sm:$0xf]
    %v264 = vld [vmem:[#allocation8 + $0x10] sm:$0xf]
    %v265 = vld [vmem:[#allocation8 + $0x14] sm:$0xf]
    %v266 = vld [vmem:[#allocation8 + $0x18] sm:$0xf]
    %v267 = vld [vmem:[#allocation8 + $0x1c] sm:$0xf]
    %v268 = vld [vmem:[#allocation8 + $0x20] sm:$0xf]
    %v269 = vld [vmem:[#allocation8 + $0x24] sm:$0xf]
    %v270 = vld [vmem:[#allocation8 + $0x28] sm:$0xf]
    %v271 = vld [vmem:[#allocation8 + $0x2c] sm:$0xf]
    %v272 = vld [vmem:[#allocation8 + $0x30] sm:$0xf]
    %v273 = vld [vmem:[#allocation8 + $0x34] sm:$0xf]
    %v274 = vld [vmem:[#allocation8 + $0x38] sm:$0xf]
    %v275 = vld [vmem:[#allocation8 + $0x3c] sm:$0xf]
    %v276 = vld [vmem:[%s6] sm:$0x1]
    %v278 = vlaneseq
    %v279 = vshrl.u32 %v278, 7
    %v280 = vsub.s32 0, %v279
    %v281 = vrot.slane %v276, %v280
    %v299 = vunpack.c.l.b16 %v260
    %v300 = vunpack.c.l.b16 %v261
    %v301 = vunpack.c.l.b16 %v262
    %v302 = vunpack.c.l.b16 %v263
    %v303 = vunpack.c.l.b16 %v264
    %v304 = vunpack.c.l.b16 %v265
    %v305 = vunpack.c.l.b16 %v266
    %v306 = vunpack.c.l.b16 %v267
    %v307 = vunpack.c.l.b16 %v268
    %v308 = vunpack.c.l.b16 %v269
    %v309 = vunpack.c.l.b16 %v270
    %v310 = vunpack.c.l.b16 %v271
    %v311 = vunpack.c.l.b16 %v272
    %v312 = vunpack.c.l.b16 %v273
    %v313 = vunpack.c.l.b16 %v274
    %v314 = vunpack.c.l.b16 %v275
    %v315 = vpack.c.b16 %v300, %v299
    %v316 = vpack.c.b16 %v302, %v301
    %v317 = vpack.c.b16 %v304, %v303
    %v318 = vpack.c.b16 %v306, %v305
    %v319 = vpack.c.b16 %v308, %v307
    %v320 = vpack.c.b16 %v310, %v309
    %v321 = vpack.c.b16 %v312, %v311
    %v322 = vpack.c.b16 %v314, %v313
    %331 = vmatprep.subr.bf16.mxu0 0
    %332 = vmatpush1.bf16.msra.mxu0 %v315
    %333 = vmatprep.subr.bf16.mxu0 0
    %334 = vmatpush1.bf16.msra.mxu0 %v316
    %335 = vmatprep.subr.bf16.mxu0 0
    %336 = vmatpush1.bf16.msra.mxu0 %v317
    %337 = vmatprep.subr.bf16.mxu0 0
    %338 = vmatpush1.bf16.msra.mxu0 %v318
    %339 = vmatprep.subr.bf16.mxu0 0
    %340 = vmatpush1.bf16.msra.mxu0 %v319
    %341 = vmatprep.subr.bf16.mxu0 0
    %342 = vmatpush1.bf16.msra.mxu0 %v320
    %343 = vmatprep.subr.bf16.mxu0 0
    %344 = vmatpush1.bf16.msra.mxu0 %v321
    %345 = vmatprep.subr.bf16.mxu0 0
    %346 = vmatpush1.bf16.msra.mxu0 %v322
    %347 = vmatprep.subr.bf16.mxu0 0
    %348 = vmatpush1.bf16.msra.mxu0 0
    %349 = vmatprep.subr.bf16.mxu0 0
    %350 = vmatpush1.bf16.msra.mxu0 0
    %351 = vmatprep.subr.bf16.mxu0 0
    %352 = vmatpush1.bf16.msra.mxu0 0
    %353 = vmatprep.subr.bf16.mxu0 0
    %354 = vmatpush1.bf16.msra.mxu0 0
    %355 = vmatprep.subr.bf16.mxu0 0
    %356 = vmatpush1.bf16.msra.mxu0 0
    %357 = vmatprep.subr.bf16.mxu0 0
    %358 = vmatpush1.bf16.msra.mxu0 0
    %359 = vmatprep.subr.bf16.mxu0 0
    %360 = vmatpush1.bf16.msra.mxu0 0
    %361 = vmatprep.subr.bf16.mxu0 0
    %362 = vmatpush1.bf16.msra.mxu0 0
    %363 = vmatprep.mubr.bf16.mxu0 0
    %364 = vmatmul.mubr.bf16.gmra.mrb[0].mxu0 %v259
    %v365 = vpop.f32.mrb[0].mxu0
    %v366 = vadd.f32 %v281, %v365
    %v367 = vpop.f32.mrb[0].mxu0
    %v368 = vpop.f32.mrb[0].mxu0
    %v369 = vpop.f32.mrb[0].mxu0
    %370 = vdwg.mxu0
    %v371 = vsub.f32 0.0, %v366
    %v372 = vmul.f32 %v371, 1.442695
    %v373 = vpow.pop %v372
    %v374 = vadd.f32 %v373, 1.0
    %v375 = vrcp.pop %v374
    %v376 = vpack.c.bf16 %v375, %v375
    %377 = vst [vmem:[#allocation10] sm:$0xf] %v376
    // Predicated region
    $region46: #{tpu_custom_call.1} parent=1 // pred_check
      _
    $region47: #{tpu_custom_call.1} parent=1 // pred_check_branch
      %379 = sbr.rel (0) target = $region49
    $region48: #{tpu_custom_call.1} parent=1 // pred_region
      %s381 = ssub.s32 64, 64
      %382 = vsyncadd [#allocation4], %s381
      %s384 = sshll.u32 [#allocation10], 4
      %s385 = int_to_ptr.vmem [resolvable:$true] %s384
      %387 = dma.vmem_to_hbm [thread:$0]  %s385, 64, %s7, [#allocation4]
    $region49: #{tpu_custom_call.1} parent=1 // pred_fallthru
      _
    // Predicated region
    $region50: #{tpu_custom_call.1} parent=1 // pred_check
      _
    $region51: #{tpu_custom_call.1} parent=1 // pred_check_branch
      %389 = sbr.rel (0) target = $region53
    $region52: #{tpu_custom_call.1} parent=1 // pred_region
      %390 = dma.done [#allocation4], 64
    $region53: #{tpu_custom_call.1} parent=1 // pred_fallthru
      _
    %391 = vsyncpa [#allocation3], 1
    %392 = vsyncpa [#allocation6], 1
    %393 = vsyncpa [#allocation9], 1
    %394 = vsyncpa [#allocation4], 1

</llo_original>
